<compile_context>
chip_gen: v6e
topology: v6e:2x2x1
jax: 0.10.0
libtpu: 0.0.40
codegen_flags: <defaults>
</compile_context>

<pallas_src>
import functools

import jax
import jax.numpy as jnp
import numpy as np
from jax.experimental import pallas as pl
from jax.experimental.pallas import tpu as pltpu


def _round_up(x, m):
    return (x + m - 1) // m * m


def _pick_tb(batch, n_cols, n_block_arrays, vmem_budget=8 * 1024 * 1024):
    """Batch-tile size: multiple of 8, capped by a conservative VMEM budget
    (double-buffered, lane-padded rows) so it is safe on v5e/v6e/v7x."""
    b8 = _round_up(max(batch, 1), 8)
    lane_cols = _round_up(max(n_cols, 1), 128)          # VMEM rows are lane-padded
    bytes_per_row = lane_cols * 4 * 2 * n_block_arrays  # f32, double-buffered
    tb = (vmem_budget // bytes_per_row) // 8 * 8
    tb = max(8, min(tb, 512, b8))
    return tb


# --------------------------------------------------------------------------
# Kernels
# --------------------------------------------------------------------------
def _ce_kernel(logits_ref, labels_ref, loss_ref, *, tb, n_valid):
    """Cross entropy (epoch <= es). loss_ref is a resident (1,1) accumulator."""
    i = pl.program_id(0)

    @pl.when(i == 0)
    def _init():
        loss_ref[...] = jnp.zeros_like(loss_ref)

    logits = logits_ref[...].astype(jnp.float32)             # (tb, C)
    labels = labels_ref[...]                                  # (tb, 1) int32

    m = jnp.max(logits, axis=1, keepdims=True)
    z = logits - m
    s = jnp.sum(jnp.exp(z), axis=1, keepdims=True)
    logp = z - jnp.log(s)                                     # log_softmax

    # -logp[label] without materializing a float one-hot.
    col = jax.lax.broadcasted_iota(jnp.int32, logits.shape, 1)
    picked = jnp.sum(jnp.where(col == labels, logp, 0.0), axis=1, keepdims=True)

    # mask padded rows (batch padded up to a multiple of tb)
    row = i * tb + jax.lax.broadcasted_iota(jnp.int32, (tb, 1), 0)
    valid = (row < n_valid).astype(jnp.float32)

    loss_ref[...] += jnp.sum(-picked * valid, axis=0, keepdims=True)

    @pl.when(i == pl.num_programs(0) - 1)
    def _fin():
        loss_ref[...] = loss_ref[...] * (1.0 / n_valid)


def _selc_kernel(logits_ref, soft_ref, loss_ref, newsoft_ref, *,
                 tb, n_valid, momentum):
    """SELC branch (epoch > es): EMA soft-label update + soft cross entropy."""
    i = pl.program_id(0)

    @pl.when(i == 0)
    def _init():
        loss_ref[...] = jnp.zeros_like(loss_ref)

    logits = logits_ref[...].astype(jnp.float32)              # (tb, C)
    soft = soft_ref[...].astype(jnp.float32)                  # (tb, C)

    m = jnp.max(logits, axis=1, keepdims=True)
    z = logits - m
    e = jnp.exp(z)
    s = jnp.sum(e, axis=1, keepdims=True)
    pred = e * (1.0 / s)              # per-row reciprocal, broadcast multiply
    logp = z - jnp.log(s)             # log_softmax

    updated = momentum * soft + (1.0 - momentum) * pred       # pred is "detached"
    newsoft_ref[...] = updated.astype(newsoft_ref.dtype)

    row = i * tb + jax.lax.broadcasted_iota(jnp.int32, (tb, 1), 0)
    valid = (row < n_valid).astype(jnp.float32)

    per = -jnp.sum(logp * updated, axis=1, keepdims=True)     # (tb, 1)
    loss_ref[...] += jnp.sum(per * valid, axis=0, keepdims=True)

    @pl.when(i == pl.num_programs(0) - 1)
    def _fin():
        loss_ref[...] = loss_ref[...] * (1.0 / n_valid)


# --------------------------------------------------------------------------
# Branch wrappers (jitted; shapes/momentum are static)
# --------------------------------------------------------------------------
@jax.jit
def _ce_branch(logits, labels):
    B, C = logits.shape
    tb = _pick_tb(B, C, n_block_arrays=2)
    Bp = _round_up(B, tb)
    labels = labels.astype(jnp.int32)
    if Bp != B:
        logits = jnp.pad(logits, ((0, Bp - B), (0, 0)))
        labels = jnp.pad(labels, ((0, Bp - B),))
    labels2d = labels.reshape(Bp, 1)
    nb = Bp // tb

    kernel = functools.partial(_ce_kernel, tb=tb, n_valid=B)
    loss = pl.pallas_call(
        kernel,
        out_shape=jax.ShapeDtypeStruct((1, 1), jnp.float32),
        grid=(nb,),
        in_specs=[
            pl.BlockSpec((tb, C), lambda i: (i, 0)),
            pl.BlockSpec((tb, 1), lambda i: (i, 0)),
        ],
        out_specs=pl.BlockSpec((1, 1), lambda i: (0, 0)),
        compiler_params=pltpu.CompilerParams(
            dimension_semantics=("arbitrary",),
            vmem_limit_bytes=32 * 1024 * 1024),
    )(logits, labels2d)
    return loss[0, 0]


@functools.partial(jax.jit, static_argnames=("momentum",))
def _selc_branch(logits, soft_table, index, *, momentum):
    B, C = logits.shape
    soft_rows = jnp.take(soft_table, index, axis=0).astype(jnp.float32)

    tb = _pick_tb(B, C, n_block_arrays=3)
    Bp = _round_up(B, tb)
    if Bp != B:
        logits = jnp.pad(logits, ((0, Bp - B), (0, 0)))
        soft_rows = jnp.pad(soft_rows, ((0, Bp - B), (0, 0)))
    nb = Bp // tb

    kernel = functools.partial(_selc_kernel, tb=tb, n_valid=B,
                               momentum=float(momentum))
    loss, new_rows = pl.pallas_call(
        kernel,
        out_shape=(
            jax.ShapeDtypeStruct((1, 1), jnp.float32),
            jax.ShapeDtypeStruct((Bp, C), jnp.float32),
        ),
        grid=(nb,),
        in_specs=[
            pl.BlockSpec((tb, C), lambda i: (i, 0)),
            pl.BlockSpec((tb, C), lambda i: (i, 0)),
        ],
        out_specs=(
            pl.BlockSpec((1, 1), lambda i: (0, 0)),
            pl.BlockSpec((tb, C), lambda i: (i, 0)),
        ),
        # gathered soft rows buffer is donated to the updated-rows output
        input_output_aliases={1: 1},
        compiler_params=pltpu.CompilerParams(
            dimension_semantics=("arbitrary",),
            vmem_limit_bytes=32 * 1024 * 1024),
    )(logits, soft_rows)

    new_table = soft_table.at[index].set(new_rows[:B])
    return loss[0, 0], new_table


# --------------------------------------------------------------------------
# Module-equivalent wrapper
# --------------------------------------------------------------------------
class SELCLossPallas:
    """JAX/Pallas port of SELCLoss; state (soft_labels) is a JAX array."""

    def __init__(self, labels, num_classes, es=10, momentum=0.9):
        labels = jnp.asarray(labels, dtype=jnp.int32)
        self.num_classes = num_classes
        self.es = es
        self.momentum = float(momentum)
        self.soft_labels = jax.nn.one_hot(labels, num_classes, dtype=jnp.float32)

    def __call__(self, logits, labels, index, epoch):
        logits = jnp.asarray(logits)
        if int(epoch) <= self.es:
            # CE branch: soft labels untouched -> no gather/scatter/writeback.
            return _ce_branch(logits, jnp.asarray(labels))
        index = jnp.asarray(index, dtype=jnp.int32)
        loss, new_table = _selc_branch(logits, self.soft_labels, index,
                                       momentum=self.momentum)
        self.soft_labels = new_table
        return loss


# --------------------------------------------------------------------------
# Pure-JAX reference (mirrors the PyTorch forward)
# --------------------------------------------------------------------------
def _reference(logits, labels, soft_rows, epoch, es, momentum):
    logp = jax.nn.log_softmax(logits, axis=1)
    if epoch <= es:
        onehot = jax.nn.one_hot(labels, logits.shape[1], dtype=jnp.float32)
        return jnp.mean(-jnp.sum(logp * onehot, axis=1)), soft_rows
    pred = jax.nn.softmax(logits, axis=1)
    updated = momentum * soft_rows + (1.0 - momentum) * pred
    return jnp.mean(-jnp.sum(logp * updated, axis=1)), updated


if __name__ == "__main__":
    key = jax.random.PRNGKey(0)
    N, B, C = 32, 8, 10          # dataset size, batch size, classes (CIFAR10-ish)
    es, momentum = 10, 0.9

    k1, k2, k3, k4, k5, k6 = jax.random.split(key, 6)
    dataset_labels = jax.random.randint(k1, (N,), 0, C, dtype=jnp.int32)
    logits = jax.random.normal(k2, (B, C), dtype=jnp.float32) * 2.0
    index = jax.random.permutation(k3, N)[:B].astype(jnp.int32)
    batch_labels = dataset_labels[index]

    selc = SELCLossPallas(dataset_labels, C, es=es, momentum=momentum)

    # --- branch 1: epoch <= es (plain cross entropy) ---
    soft_before = jnp.take(selc.soft_labels, index, axis=0)
    loss_ce = selc(logits, batch_labels, index, epoch=5)
    jax.block_until_ready(loss_ce)
    ref_ce, _ = _reference(logits, batch_labels, soft_before, 5, es, momentum)
    assert np.allclose(np.asarray(loss_ce), np.asarray(ref_ce), rtol=2e-5, atol=2e-5)

    # --- branch 2: epoch > es (soft-label EMA update + SELC loss) ---
    soft_before = jnp.take(selc.soft_labels, index, axis=0)
    loss_selc = selc(logits, batch_labels, index, epoch=12)
    jax.block_until_ready(loss_selc)
    ref_selc, ref_rows = _reference(logits, batch_labels, soft_before, 12, es, momentum)
    assert np.allclose(np.asarray(loss_selc), np.asarray(ref_selc), rtol=2e-5, atol=2e-5)
    assert np.allclose(np.asarray(jnp.take(selc.soft_labels, index, axis=0)),
                       np.asarray(ref_rows), rtol=2e-5, atol=2e-5)

    # --- branch 3: batch not a multiple of 8 (exercises padding + masking) ---
    B2 = 6
    logits2 = jax.random.normal(k5, (B2, C), dtype=jnp.float32) * 2.0
    index2 = jax.random.permutation(k6, N)[:B2].astype(jnp.int32)
    labels2 = dataset_labels[index2]

    soft_before2 = jnp.take(selc.soft_labels, index2, axis=0)
    loss_ce2 = selc(logits2, labels2, index2, epoch=3)
    ref_ce2, _ = _reference(logits2, labels2, soft_before2, 3, es, momentum)
    assert np.allclose(np.asarray(loss_ce2), np.asarray(ref_ce2), rtol=2e-5, atol=2e-5)

    loss_selc2 = selc(logits2, labels2, index2, epoch=20)
    ref_selc2, ref_rows2 = _reference(logits2, labels2, soft_before2, 20, es, momentum)
    assert np.allclose(np.asarray(loss_selc2), np.asarray(ref_selc2), rtol=2e-5, atol=2e-5)
    assert np.allclose(np.asarray(jnp.take(selc.soft_labels, index2, axis=0)),
                       np.asarray(ref_rows2), rtol=2e-5, atol=2e-5)

    print("KERNEL_OK")
</pallas_src>

<mosaic_0001>
module attributes {stable_mosaic.version = 11 : i64} {
  func.func @_ce_kernel(%arg0: i32, %arg1: memref<8x10xf32, #tpu.memory_space<vmem>>, %arg2: memref<8x1xi32, #tpu.memory_space<vmem>>, %arg3: memref<1x1xf32, #tpu.memory_space<vmem>>) attributes {dimension_semantics = [#tpu.dimension_semantics<arbitrary>], iteration_bounds = array<i64: 1>, scalar_prefetch = 0 : i64, scratch_operands = 0 : i64, tpu.core_type = #tpu.core_type<tc>, window_params = [{transform_indices = @transform_0, window_bounds = array<i64: 8, 10>}, {transform_indices = @transform_1, window_bounds = array<i64: 8, 1>}, {pipeline_mode = #tpu.pipeline_mode<synchronous>, transform_indices = @transform_2, window_bounds = array<i64: 1, 1>}]} {
    %c0_i32 = arith.constant 0 : i32
    %0 = arith.cmpi eq, %arg0, %c0_i32 : i32
    %1 = arith.extui %0 : i1 to i32
    %c0_i32_0 = arith.constant 0 : i32
    %2 = arith.cmpi ne, %1, %c0_i32_0 : i32
    scf.if %2 {
      %cst_16 = arith.constant 0.000000e+00 : f32
      %41 = vector.broadcast %cst_16 : f32 to vector<1x1xf32>
      %c0_17 = arith.constant 0 : index
      %c0_18 = arith.constant 0 : index
      %42 = vector.load %arg3[%c0_17, %c0_18] : memref<1x1xf32, #tpu.memory_space<vmem>>, vector<1x1xf32>
      tpu.vector_store %arg3[%c0_17, %c0_18], %41 {strides = array<i32>} : memref<1x1xf32, #tpu.memory_space<vmem>>, vector<1x1xf32>,
    } else {
    }
    %c0 = arith.constant 0 : index
    %c0_1 = arith.constant 0 : index
    %3 = vector.load %arg1[%c0, %c0_1] : memref<8x10xf32, #tpu.memory_space<vmem>>, vector<8x10xf32>
    %c0_2 = arith.constant 0 : index
    %c0_3 = arith.constant 0 : index
    %4 = vector.load %arg2[%c0_2, %c0_3] : memref<8x1xi32, #tpu.memory_space<vmem>>, vector<8x1xi32>
    %cst = arith.constant dense<0xFF800000> : vector<8xf32>
    %5 = vector.multi_reduction <maximumf>, %3, %cst [1] : vector<8x10xf32> to vector<8xf32>
    %6 = vector.shape_cast %5 : vector<8xf32> to vector<8x1xf32>
    %7 = vector.broadcast %6 : vector<8x1xf32> to vector<8x10xf32>
    %8 = arith.subf %3, %7 : vector<8x10xf32>
    %9 = math.exp %8 : vector<8x10xf32>
    %cst_4 = arith.constant dense<0.000000e+00> : vector<8xf32>
    %10 = vector.multi_reduction <add>, %9, %cst_4 [1] : vector<8x10xf32> to vector<8xf32>
    %11 = vector.shape_cast %10 : vector<8xf32> to vector<8x1xf32>
    %12 = math.log %11 : vector<8x1xf32>
    %13 = vector.broadcast %12 : vector<8x1xf32> to vector<8x10xf32>
    %14 = arith.subf %8, %13 : vector<8x10xf32>
    %15 = tpu.iota {dimensions = array<i32: 1>} : vector<8x10xi32>
    %16 = vector.broadcast %4 : vector<8x1xi32> to vector<8x10xi32>
    %17 = arith.cmpi eq, %15, %16 : vector<8x10xi32>
    %cst_5 = arith.constant 0.000000e+00 : f32
    %18 = vector.broadcast %cst_5 : f32 to vector<8x10xf32>
    %19 = arith.select %17, %14, %18 : vector<8x10xi1>, vector<8x10xf32>
    %cst_6 = arith.constant dense<0.000000e+00> : vector<8xf32>
    %20 = vector.multi_reduction <add>, %19, %cst_6 [1] : vector<8x10xf32> to vector<8xf32>
    %21 = vector.shape_cast %20 : vector<8xf32> to vector<8x1xf32>
    %c8_i32 = arith.constant 8 : i32
    %22 = arith.muli %arg0, %c8_i32 : i32
    %23 = tpu.iota {dimensions = array<i32: 0>} : vector<8x1xi32>
    %24 = vector.broadcast %22 : i32 to vector<8x1xi32>
    %25 = arith.addi %24, %23 : vector<8x1xi32>
    %c8_i32_7 = arith.constant 8 : i32
    %26 = vector.broadcast %c8_i32_7 : i32 to vector<8x1xi32>
    %27 = arith.cmpi slt, %25, %26 : vector<8x1xi32>
    %28 = arith.extui %27 : vector<8x1xi1> to vector<8x1xi32>
    %29 = arith.sitofp %28 : vector<8x1xi32> to vector<8x1xf32>
    %c0_8 = arith.constant 0 : index
    %c0_9 = arith.constant 0 : index
    %30 = vector.load %arg3[%c0_8, %c0_9] : memref<1x1xf32, #tpu.memory_space<vmem>>, vector<1x1xf32>
    %cst_10 = arith.constant 0.000000e+00 : f32
    %31 = vector.broadcast %cst_10 : f32 to vector<8x1xf32>
    %32 = arith.subf %31, %21 : vector<8x1xf32>
    %33 = arith.mulf %32, %29 : vector<8x1xf32>
    %cst_11 = arith.constant dense<0.000000e+00> : vector<1xf32>
    %34 = vector.multi_reduction <add>, %33, %cst_11 [0] : vector<8x1xf32> to vector<1xf32>
    %35 = vector.shape_cast %34 : vector<1xf32> to vector<1x1xf32>
    %36 = arith.addf %30, %35 : vector<1x1xf32>
    %c0_12 = arith.constant 0 : index
    %c0_13 = arith.constant 0 : index
    %37 = vector.load %arg3[%c0_12, %c0_13] : memref<1x1xf32, #tpu.memory_space<vmem>>, vector<1x1xf32>
    tpu.vector_store %arg3[%c0_12, %c0_13], %36 {strides = array<i32>} : memref<1x1xf32, #tpu.memory_space<vmem>>, vector<1x1xf32>,
    %c0_i32_14 = arith.constant 0 : i32
    %38 = arith.cmpi eq, %arg0, %c0_i32_14 : i32
    %39 = arith.extui %38 : i1 to i32
    %c0_i32_15 = arith.constant 0 : i32
    %40 = arith.cmpi ne, %39, %c0_i32_15 : i32
    scf.if %40 {
      %c0_16 = arith.constant 0 : index
      %c0_17 = arith.constant 0 : index
      %41 = vector.load %arg3[%c0_16, %c0_17] : memref<1x1xf32, #tpu.memory_space<vmem>>, vector<1x1xf32>
      %cst_18 = arith.constant 1.250000e-01 : f32
      %42 = vector.broadcast %cst_18 : f32 to vector<1x1xf32>
      %43 = arith.mulf %41, %42 : vector<1x1xf32>
      %c0_19 = arith.constant 0 : index
      %c0_20 = arith.constant 0 : index
      %44 = vector.load %arg3[%c0_19, %c0_20] : memref<1x1xf32, #tpu.memory_space<vmem>>, vector<1x1xf32>
      tpu.vector_store %arg3[%c0_19, %c0_20], %43 {strides = array<i32>} : memref<1x1xf32, #tpu.memory_space<vmem>>, vector<1x1xf32>,
    } else {
    }
    return
  }
  func.func @transform_0(%arg0: i32) -> (i32, i32) {
    %c0_i32 = arith.constant 0 : i32
    %c0_i32_0 = arith.constant 0 : i32
    return %arg0, %c0_i32 : i32, i32
  }
  func.func @transform_1(%arg0: i32) -> (i32, i32) {
    %c0_i32 = arith.constant 0 : i32
    %c0_i32_0 = arith.constant 0 : i32
    return %arg0, %c0_i32 : i32, i32
  }
  func.func @transform_2(%arg0: i32) -> (i32, i32) {
    %c0_i32 = arith.constant 0 : i32
    %c0_i32_0 = arith.constant 0 : i32
    %c0_i32_1 = arith.constant 0 : i32
    return %c0_i32, %c0_i32_0 : i32, i32
  }
}

</mosaic_0001>

<llo_original>
// kernel: _ce_branch.1
$region0: #{_ce_branch.1}
  #allocation0 [shape = 'u32[]', space=smem, size = 0x4, offset = 0x4, fixed_abs, tag = 'smem constant byte address 0x4 - core index']
  #allocation1 [shape = 'u32[144,128]{1,0:T(1,128)}', space=vmem, size = 0x12000, scoped, tag = 'internal scratch']
  %s0 = inlined_call_operand.vmem [shape: f32[8,10], index: 0, kind: input, shape index: {}]
  %s1 = inlined_call_operand.vmem [shape: s32[8,1], index: 1, kind: input, shape index: {}]
  %s2 = inlined_call_operand.hbm [shape: f32[1,1], index: 2, kind: output, shape index: {}]
  %s3 = sld [smem:[#allocation0]]
  $region26: #{_ce_branch.1} parent=0
    _
  %s5 = ssub.s32 1, %s3
  %s6 = scalar_select 0, %s5, %s3
  $region1: #{_ce_branch.1} parent=0
    #allocation2 [shape = 'u8[512]{0}', space=vmem, size = 0x400, scoped, tag = 'output window, operand 0, single buffered']
    #allocation3 [shape = 's32[1]{0}', space=sflag, size = 0x4, scoped, tag = 'scoped memory for _ce_branch.1']
    %7 = vsyncpa [#allocation3], 0
    // Predicated region
    $region2: #{_ce_branch.1} parent=1 // pred_check
      _
    $region3: #{_ce_branch.1} parent=1 // pred_check_branch
      %9 = sbr.rel (0) target = $region5
    $region4: #{_ce_branch.1} parent=1 // pred_region
      _
    $region5: #{_ce_branch.1} parent=1 // pred_fallthru
      _
    // Predicated region
    $region6: #{_ce_branch.1} parent=1 // pred_check
      _
    $region7: #{_ce_branch.1} parent=1 // pred_check_branch
      %11 = sbr.rel (0) target = $region9
    $region8: #{_ce_branch.1} parent=1 // pred_region
      _
    $region9: #{_ce_branch.1} parent=1 // pred_fallthru
      _
    %p12 = scmp.eq.s32.totalorder 0, 0
    // Predicated region
    $region10: #{_ce_branch.1} parent=1 // pred_check
      %p13 = pneg %p12
    $region11: #{_ce_branch.1} parent=1 // pred_check_branch
      %15 = sbr.rel (%p13) target = $region13
    $region12: #{_ce_branch.1} parent=1 // pred_region
      %vm16 = vcmask 0
      %17 = vst.msk [vmem:[#allocation2] sm:$0x1] %vm16, 0.0
    $region13: #{_ce_branch.1} parent=1 // pred_fallthru
      _
    %v18 = vld [vmem:[%s0] sm:$0xff]
    %v19 = vld [vmem:[%s1] sm:$0xff]
    %vm20 = vcmask 80896
    %v21 = vsel %vm20, %v18, -inf
    %22 = vmax.xlane.f32.xlu0 %v21
    %v23 = vpop.xlane.xlu0 %22
    %v24 = vsub.f32 %v18, %v23
    %v25 = vmul.f32 %v24, 1.442695
    %v26 = vpow.pop %v25
    %v27 = vsel %vm20, %v26, 0.0
    %28 = vadd.xlane.f32.xlu0 %v27
    %v29 = vpop.xlane.xlu0 %28
    %v30 = vlog2.pop %v29
    %v31 = vmul.f32 %v30, 0.6931472
    %v32 = vsub.f32 %v24, %v31
    %v33 = vlaneseq
    %v34 = vand.u32 %v33, 127
    %35 = vset.pattern.permute.xlu0 0
    %36 = vperm.xlu0 %35, %v19
    %v37 = vpop.permute.xlu0 %36
    %vm38 = vcmp.eq.s32.totalorder %v34, %v37
    %v39 = vsel %vm38, %v32, 0.0
    %v40 = vsel %vm20, %v39, 0.0
    %41 = vadd.xlane.f32.xlu0 %v40
    %v42 = vpop.xlane.xlu0 %41
    %s43 = smul.u32 0, 8
    %v44 = vlaneseq
    %v45 = vshrl.u32 %v44, 7
    %v46 = vstv %s43
    %v47 = vadd.s32 %v46, %v45
    %vm48 = vcmp.lt.s32.totalorder %v47, 8
    %v49 = vsel %vm48, 1, 0
    %v50 = vcvt.s32.f32 %v49
    %v51 = vld [vmem:[#allocation2] sm:$0x1]
    %v52 = vsub.f32 0.0, %v42
    %v53 = vmul.f32 %v52, %v50
    %v54 = vrot.slane %v53, 4
    %v55 = vadd.f32 %v53, %v54
    %v56 = vrot.slane %v55, 2
    %v57 = vadd.f32 %v55, %v56
    %v58 = vrot.slane %v57, 1
    %v59 = vadd.f32 %v57, %v58
    %v60 = vadd.f32 %v51, %v59
    %vm61 = vcmask 0
    %62 = vst.msk [vmem:[#allocation2] sm:$0x1] %vm61, %v60
    // Predicated region
    $region14: #{_ce_branch.1} parent=1 // pred_check
      %p63 = pneg %p12
    $region15: #{_ce_branch.1} parent=1 // pred_check_branch
      %65 = sbr.rel (%p63) target = $region17
    $region16: #{_ce_branch.1} parent=1 // pred_region
      %v66 = vld [vmem:[#allocation2] sm:$0x1]
      %v67 = vmul.f32 %v66, 0.125
      %68 = vst.msk [vmem:[#allocation2] sm:$0x1] %vm61, %v67
    $region17: #{_ce_branch.1} parent=1 // pred_fallthru
      _
    // Predicated region
    $region18: #{_ce_branch.1} parent=1 // pred_check
      _
    $region19: #{_ce_branch.1} parent=1 // pred_check_branch
      %70 = sbr.rel (0) target = $region21
    $region20: #{_ce_branch.1} parent=1 // pred_region
      %s72 = ssub.s32 16, 16
      %73 = vsyncadd [#allocation3], %s72
      %s75 = sshll.u32 [#allocation2], 4
      %s76 = int_to_ptr.vmem [resolvable:$true] %s75
      %78 = dma.vmem_to_hbm [thread:$0]  %s76, 16, %s2, [#allocation3]
    $region21: #{_ce_branch.1} parent=1 // pred_fallthru
      _
    // Predicated region
    $region22: #{_ce_branch.1} parent=1 // pred_check
      _
    $region23: #{_ce_branch.1} parent=1 // pred_check_branch
      %80 = sbr.rel (0) target = $region25
    $region24: #{_ce_branch.1} parent=1 // pred_region
      %81 = dma.done [#allocation3], 16
    $region25: #{_ce_branch.1} parent=1 // pred_fallthru
      _
    %82 = vsyncpa [#allocation3], 1

</llo_original>
